<compile_context>
chip_gen: v7x
topology: tpu7x:2x2x1
jax: 0.10.0
libtpu: 0.0.40
codegen_flags: <defaults>
</compile_context>

<pallas_src>
import jax
import jax.numpy as jnp
from jax.experimental import pallas as pl
from jax.experimental.pallas import tpu as pltpu

BN_EPS = 1e-5
NEG_INF = -1e30  # bias for padded logit columns -> exp() == 0 exactly
LANE = 128


def _round_up(n, m):
    return (n + m - 1) // m * m


def _bn_relu(h, gamma, beta):
    # Training-mode BatchNorm1d (biased variance over the batch axis),
    # one-pass statistics folded into a single multiply-add, fused with ReLU.
    mean = jnp.mean(h, axis=0, keepdims=True)
    msq = jnp.mean(h * h, axis=0, keepdims=True)
    var = jnp.maximum(msq - mean * mean, 0.0)
    scale = gamma * jax.lax.rsqrt(var + BN_EPS)
    shift = beta - mean * scale
    return jnp.maximum(h * scale + shift, 0.0)


def encoder_kernel(x_ref,
                   w1_ref, g1_ref, be1_ref,
                   w2_ref, g2_ref, be2_ref,
                   w3_ref, b3_ref,
                   o_ref):
    x = x_ref[...].astype(jnp.float32)

    # dropout1/2/3 (p=0) -> identity.
    # fc1 (pre-BN bias dropped: cancelled by BN mean subtraction) -> BN -> ReLU
    h1 = jnp.dot(x, w1_ref[...], preferred_element_type=jnp.float32)
    h1 = _bn_relu(h1, g1_ref[...], be1_ref[...])

    # fc2 (pre-BN bias dropped) -> BN -> ReLU
    h2 = jnp.dot(h1, w2_ref[...], preferred_element_type=jnp.float32)
    h2 = _bn_relu(h2, g2_ref[...], be2_ref[...])

    # fc3 + softmax along the feature axis (F.softmax on 2-D input -> dim=1).
    # Padded logit columns carry a -1e30 bias so their probability is exactly 0.
    logits = jnp.dot(h2, w3_ref[...], preferred_element_type=jnp.float32) + b3_ref[...]
    logits = logits - jnp.max(logits, axis=-1, keepdims=True)
    e = jnp.exp(logits)
    s = jnp.sum(e, axis=-1, keepdims=True)
    r = pl.reciprocal(s, approx=True)   # EUP slot (otherwise idle)
    r = r * (2.0 - s * r)               # one Newton step -> <1e-6 rel. error
    o_ref[...] = (e * r).astype(o_ref.dtype)


def encoder_forward(x, params, out_dim):
    """x: (B, input_dim) float32. params: dict of padded, pre-transposed weights.

    Returns (B, out_dim) softmax probabilities.
    """
    B, in_dim = x.shape
    hid_pad = params["w1"].shape[1]
    out_pad = params["w3"].shape[1]

    flops = 2 * B * (in_dim * hid_pad + hid_pad * hid_pad + hid_pad * out_pad)
    bytes_accessed = (sum(int(v.size) for v in params.values())
                      + int(x.size) + B * out_pad) * 4
    cost = pl.CostEstimate(flops=flops,
                           transcendentals=B * out_pad,
                           bytes_accessed=bytes_accessed)

    vmem_spec = pl.BlockSpec(memory_space=pltpu.MemorySpace.VMEM)
    args = (
        x,
        params["w1"], params["g1"], params["be1"],
        params["w2"], params["g2"], params["be2"],
        params["w3"], params["b3"],
    )
    out_padded = pl.pallas_call(
        encoder_kernel,
        out_shape=jax.ShapeDtypeStruct((B, out_pad), jnp.float32),
        in_specs=[vmem_spec] * len(args),
        out_specs=vmem_spec,
        cost_estimate=cost,
    )(*args)
    return out_padded[:, :out_dim]


def init_params(key, input_dim, output_dim, hidden_dim):
    """Init mimicking PyTorch Linear defaults (uniform +/- 1/sqrt(fan_in)).

    Weights are stored transposed (in_features, out_features) and zero-padded so
    hidden/output feature dims are multiples of 128.  b1/b2 are not materialized
    (cancelled by BN).  Padded gamma/beta are zero; padded b3 columns are -1e30.
    """
    H = _round_up(hidden_dim, LANE)
    O = _round_up(output_dim, LANE)
    ks = jax.random.split(key, 4)

    def linear_w(k, fan_in, fan_out, rows_pad, cols_pad):
        bound = 1.0 / jnp.sqrt(fan_in)
        w = jax.random.uniform(k, (fan_in, fan_out), jnp.float32, -bound, bound)
        return jnp.zeros((rows_pad, cols_pad), jnp.float32).at[:fan_in, :fan_out].set(w)

    w1 = linear_w(ks[0], input_dim, hidden_dim, input_dim, H)
    w2 = linear_w(ks[1], hidden_dim, hidden_dim, H, H)
    w3 = linear_w(ks[2], hidden_dim, output_dim, H, O)

    bound3 = 1.0 / jnp.sqrt(hidden_dim)
    b3_true = jax.random.uniform(ks[3], (1, output_dim), jnp.float32, -bound3, bound3)
    b3 = jnp.full((1, O), NEG_INF, jnp.float32).at[:, :output_dim].set(b3_true)

    def gamma_pad():
        return jnp.zeros((1, H), jnp.float32).at[:, :hidden_dim].set(1.0)

    def beta_pad():
        return jnp.zeros((1, H), jnp.float32)

    return dict(
        w1=w1, g1=gamma_pad(), be1=beta_pad(),
        w2=w2, g2=gamma_pad(), be2=beta_pad(),
        w3=w3, b3=b3,
    )


if __name__ == "__main__":
    key = jax.random.PRNGKey(0)
    k_x, k_p = jax.random.split(key)

    B, input_dim, hidden_dim, output_dim = 8, 32, 100, 10
    x = jax.random.normal(k_x, (B, input_dim), jnp.float32)
    params = init_params(k_p, input_dim, output_dim, hidden_dim)

    out = encoder_forward(x, params, output_dim)
    out = jax.block_until_ready(out)

    assert out.shape == (B, output_dim)
    # softmax rows must sum to 1 (padded columns contribute exactly 0 mass)
    assert jnp.allclose(jnp.sum(out, axis=-1), 1.0, atol=1e-5)
    assert bool(jnp.all(out >= 0.0))
    print("KERNEL_OK")
</pallas_src>

<mosaic_0001>
module attributes {stable_mosaic.version = 11 : i64} {
  func.func @encoder_kernel(%arg0: memref<8x32xf32, #tpu.memory_space<vmem>>, %arg1: memref<32x128xf32, #tpu.memory_space<vmem>>, %arg2: memref<1x128xf32, #tpu.memory_space<vmem>>, %arg3: memref<1x128xf32, #tpu.memory_space<vmem>>, %arg4: memref<128x128xf32, #tpu.memory_space<vmem>>, %arg5: memref<1x128xf32, #tpu.memory_space<vmem>>, %arg6: memref<1x128xf32, #tpu.memory_space<vmem>>, %arg7: memref<128x128xf32, #tpu.memory_space<vmem>>, %arg8: memref<1x128xf32, #tpu.memory_space<vmem>>, %arg9: memref<8x128xf32, #tpu.memory_space<vmem>>) attributes {dimension_semantics = [], scalar_prefetch = 0 : i64, scratch_operands = 0 : i64, tpu.core_type = #tpu.core_type<tc>} {
    %c0 = arith.constant 0 : index
    %c0_0 = arith.constant 0 : index
    %0 = vector.load %arg0[%c0, %c0_0] : memref<8x32xf32, #tpu.memory_space<vmem>>, vector<8x32xf32>
    %c0_1 = arith.constant 0 : index
    %c0_2 = arith.constant 0 : index
    %1 = vector.load %arg1[%c0_1, %c0_2] : memref<32x128xf32, #tpu.memory_space<vmem>>, vector<32x128xf32>
    %cst = arith.constant dense<0.000000e+00> : vector<8x128xf32>
    %2 = tpu.matmul %0, %1, %cst {dimension_numbers = #tpu.dot_dimension_numbers<[1], [0], [0], [1], [0, 0, 1, 1], [], []>} : vector<8x32xf32>, vector<32x128xf32>, vector<8x128xf32> -> vector<8x128xf32>
    %c0_3 = arith.constant 0 : index
    %c0_4 = arith.constant 0 : index
    %3 = vector.load %arg2[%c0_3, %c0_4] : memref<1x128xf32, #tpu.memory_space<vmem>>, vector<1x128xf32>
    %c0_5 = arith.constant 0 : index
    %c0_6 = arith.constant 0 : index
    %4 = vector.load %arg3[%c0_5, %c0_6] : memref<1x128xf32, #tpu.memory_space<vmem>>, vector<1x128xf32>
    %cst_7 = arith.constant dense<0.000000e+00> : vector<128xf32>
    %5 = vector.multi_reduction <add>, %2, %cst_7 [0] : vector<8x128xf32> to vector<128xf32>
    %6 = vector.shape_cast %5 : vector<128xf32> to vector<1x128xf32>
    %cst_8 = arith.constant 8.000000e+00 : f32
    %7 = vector.broadcast %cst_8 : f32 to vector<1x128xf32>
    %8 = arith.divf %6, %7 : vector<1x128xf32>
    %9 = arith.mulf %2, %2 : vector<8x128xf32>
    %cst_9 = arith.constant dense<0.000000e+00> : vector<128xf32>
    %10 = vector.multi_reduction <add>, %9, %cst_9 [0] : vector<8x128xf32> to vector<128xf32>
    %11 = vector.shape_cast %10 : vector<128xf32> to vector<1x128xf32>
    %cst_10 = arith.constant 8.000000e+00 : f32
    %12 = vector.broadcast %cst_10 : f32 to vector<1x128xf32>
    %13 = arith.divf %11, %12 : vector<1x128xf32>
    %14 = arith.mulf %8, %8 : vector<1x128xf32>
    %15 = arith.subf %13, %14 : vector<1x128xf32>
    %cst_11 = arith.constant 0.000000e+00 : f32
    %16 = vector.broadcast %cst_11 : f32 to vector<1x128xf32>
    %17 = arith.maximumf %15, %16 : vector<1x128xf32>
    %cst_12 = arith.constant 9.99999974E-6 : f32
    %18 = vector.broadcast %cst_12 : f32 to vector<1x128xf32>
    %19 = arith.addf %17, %18 : vector<1x128xf32>
    %20 = math.rsqrt %19 : vector<1x128xf32>
    %21 = arith.mulf %3, %20 : vector<1x128xf32>
    %22 = arith.mulf %8, %21 : vector<1x128xf32>
    %23 = arith.subf %4, %22 : vector<1x128xf32>
    %24 = vector.broadcast %21 : vector<1x128xf32> to vector<8x128xf32>
    %25 = arith.mulf %2, %24 : vector<8x128xf32>
    %26 = vector.broadcast %23 : vector<1x128xf32> to vector<8x128xf32>
    %27 = arith.addf %25, %26 : vector<8x128xf32>
    %cst_13 = arith.constant 0.000000e+00 : f32
    %28 = vector.broadcast %cst_13 : f32 to vector<8x128xf32>
    %29 = arith.maximumf %27, %28 : vector<8x128xf32>
    %c0_14 = arith.constant 0 : index
    %c0_15 = arith.constant 0 : index
    %30 = vector.load %arg4[%c0_14, %c0_15] : memref<128x128xf32, #tpu.memory_space<vmem>>, vector<128x128xf32>
    %cst_16 = arith.constant dense<0.000000e+00> : vector<8x128xf32>
    %31 = tpu.matmul %29, %30, %cst_16 {dimension_numbers = #tpu.dot_dimension_numbers<[1], [0], [0], [1], [0, 0, 1, 1], [], []>} : vector<8x128xf32>, vector<128x128xf32>, vector<8x128xf32> -> vector<8x128xf32>
    %c0_17 = arith.constant 0 : index
    %c0_18 = arith.constant 0 : index
    %32 = vector.load %arg5[%c0_17, %c0_18] : memref<1x128xf32, #tpu.memory_space<vmem>>, vector<1x128xf32>
    %c0_19 = arith.constant 0 : index
    %c0_20 = arith.constant 0 : index
    %33 = vector.load %arg6[%c0_19, %c0_20] : memref<1x128xf32, #tpu.memory_space<vmem>>, vector<1x128xf32>
    %cst_21 = arith.constant dense<0.000000e+00> : vector<128xf32>
    %34 = vector.multi_reduction <add>, %31, %cst_21 [0] : vector<8x128xf32> to vector<128xf32>
    %35 = vector.shape_cast %34 : vector<128xf32> to vector<1x128xf32>
    %cst_22 = arith.constant 8.000000e+00 : f32
    %36 = vector.broadcast %cst_22 : f32 to vector<1x128xf32>
    %37 = arith.divf %35, %36 : vector<1x128xf32>
    %38 = arith.mulf %31, %31 : vector<8x128xf32>
    %cst_23 = arith.constant dense<0.000000e+00> : vector<128xf32>
    %39 = vector.multi_reduction <add>, %38, %cst_23 [0] : vector<8x128xf32> to vector<128xf32>
    %40 = vector.shape_cast %39 : vector<128xf32> to vector<1x128xf32>
    %cst_24 = arith.constant 8.000000e+00 : f32
    %41 = vector.broadcast %cst_24 : f32 to vector<1x128xf32>
    %42 = arith.divf %40, %41 : vector<1x128xf32>
    %43 = arith.mulf %37, %37 : vector<1x128xf32>
    %44 = arith.subf %42, %43 : vector<1x128xf32>
    %cst_25 = arith.constant 0.000000e+00 : f32
    %45 = vector.broadcast %cst_25 : f32 to vector<1x128xf32>
    %46 = arith.maximumf %44, %45 : vector<1x128xf32>
    %cst_26 = arith.constant 9.99999974E-6 : f32
    %47 = vector.broadcast %cst_26 : f32 to vector<1x128xf32>
    %48 = arith.addf %46, %47 : vector<1x128xf32>
    %49 = math.rsqrt %48 : vector<1x128xf32>
    %50 = arith.mulf %32, %49 : vector<1x128xf32>
    %51 = arith.mulf %37, %50 : vector<1x128xf32>
    %52 = arith.subf %33, %51 : vector<1x128xf32>
    %53 = vector.broadcast %50 : vector<1x128xf32> to vector<8x128xf32>
    %54 = arith.mulf %31, %53 : vector<8x128xf32>
    %55 = vector.broadcast %52 : vector<1x128xf32> to vector<8x128xf32>
    %56 = arith.addf %54, %55 : vector<8x128xf32>
    %cst_27 = arith.constant 0.000000e+00 : f32
    %57 = vector.broadcast %cst_27 : f32 to vector<8x128xf32>
    %58 = arith.maximumf %56, %57 : vector<8x128xf32>
    %c0_28 = arith.constant 0 : index
    %c0_29 = arith.constant 0 : index
    %59 = vector.load %arg7[%c0_28, %c0_29] : memref<128x128xf32, #tpu.memory_space<vmem>>, vector<128x128xf32>
    %cst_30 = arith.constant dense<0.000000e+00> : vector<8x128xf32>
    %60 = tpu.matmul %58, %59, %cst_30 {dimension_numbers = #tpu.dot_dimension_numbers<[1], [0], [0], [1], [0, 0, 1, 1], [], []>} : vector<8x128xf32>, vector<128x128xf32>, vector<8x128xf32> -> vector<8x128xf32>
    %c0_31 = arith.constant 0 : index
    %c0_32 = arith.constant 0 : index
    %61 = vector.load %arg8[%c0_31, %c0_32] : memref<1x128xf32, #tpu.memory_space<vmem>>, vector<1x128xf32>
    %62 = vector.broadcast %61 : vector<1x128xf32> to vector<8x128xf32>
    %63 = arith.addf %60, %62 : vector<8x128xf32>
    %cst_33 = arith.constant dense<0xFF800000> : vector<8xf32>
    %64 = vector.multi_reduction <maximumf>, %63, %cst_33 [1] : vector<8x128xf32> to vector<8xf32>
    %65 = vector.shape_cast %64 : vector<8xf32> to vector<8x1xf32>
    %66 = vector.broadcast %65 : vector<8x1xf32> to vector<8x128xf32>
    %67 = arith.subf %63, %66 : vector<8x128xf32>
    %68 = math.exp %67 : vector<8x128xf32>
    %cst_34 = arith.constant dense<0.000000e+00> : vector<8xf32>
    %69 = vector.multi_reduction <add>, %68, %cst_34 [1] : vector<8x128xf32> to vector<8xf32>
    %70 = vector.shape_cast %69 : vector<8xf32> to vector<8x1xf32>
    %71 = tpu.reciprocal %70 {approx = true} : vector<8x1xf32> -> vector<8x1xf32>
    %72 = arith.mulf %70, %71 : vector<8x1xf32>
    %cst_35 = arith.constant 2.000000e+00 : f32
    %73 = vector.broadcast %cst_35 : f32 to vector<8x1xf32>
    %74 = arith.subf %73, %72 : vector<8x1xf32>
    %75 = arith.mulf %71, %74 : vector<8x1xf32>
    %76 = vector.broadcast %75 : vector<8x1xf32> to vector<8x128xf32>
    %77 = arith.mulf %68, %76 : vector<8x128xf32>
    %c0_36 = arith.constant 0 : index
    %c0_37 = arith.constant 0 : index
    %78 = vector.load %arg9[%c0_36, %c0_37] : memref<8x128xf32, #tpu.memory_space<vmem>>, vector<8x128xf32>
    tpu.vector_store %arg9[%c0_36, %c0_37], %77 {strides = array<i32>} : memref<8x128xf32, #tpu.memory_space<vmem>>, vector<8x128xf32>,
    return
  }
}

</mosaic_0001>

<llo_original>
// kernel: tpu_custom_call.1
$region0: #{tpu_custom_call.1}
  #allocation0 [shape = 'u32[]', space=smem, size = 0x4, offset = 0x4, fixed_abs, tag = 'smem constant byte address 0x4 - core index']
  #allocation1 [shape = 'u32[144,128]{1,0:T(1,128)}', space=vmem, size = 0x12000, scoped, tag = 'internal scratch']
  %s0 = inlined_call_operand.hbm [shape: f32[8,32], index: 0, kind: input, shape index: {}]
  %s1 = inlined_call_operand.hbm [shape: f32[32,128], index: 1, kind: input, shape index: {}]
  %s2 = inlined_call_operand.vmem [shape: f32[1,128], index: 2, kind: input, shape index: {}]
  %s3 = inlined_call_operand.vmem [shape: f32[1,128], index: 3, kind: input, shape index: {}]
  %s4 = inlined_call_operand.hbm [shape: f32[128,128], index: 4, kind: input, shape index: {}]
  %s5 = inlined_call_operand.vmem [shape: f32[1,128], index: 5, kind: input, shape index: {}]
  %s6 = inlined_call_operand.vmem [shape: f32[1,128], index: 6, kind: input, shape index: {}]
  %s7 = inlined_call_operand.hbm [shape: f32[128,128], index: 7, kind: input, shape index: {}]
  %s8 = inlined_call_operand.vmem [shape: f32[1,128], index: 8, kind: input, shape index: {}]
  %s9 = inlined_call_operand.hbm [shape: f32[8,128], index: 9, kind: output, shape index: {}]
  %s10 = sld [smem:[#allocation0]]
  $region62: #{tpu_custom_call.1} parent=0
    _
  %s12 = ssub.s32 1, %s10
  %s13 = scalar_select 0, %s12, %s10
  $region1: #{tpu_custom_call.1} parent=0
    #allocation2 [shape = 'u8[4096]{0}', space=vmem, size = 0x1000, scoped, tag = 'input window, operand 0, single buffered']
    #allocation3 [shape = 's32[1]{0}', space=sflag, size = 0x4, scoped, tag = 'scoped memory for tpu_custom_call.1']
    #allocation4 [shape = 's32[1]{0}', space=sflag, size = 0x4, scoped, tag = 'scoped memory for tpu_custom_call.1']
    #allocation5 [shape = 'u8[16384]{0}', space=vmem, size = 0x4000, scoped, tag = 'input window, operand 1, single buffered']
    #allocation6 [shape = 's32[1]{0}', space=sflag, size = 0x4, scoped, tag = 'scoped memory for tpu_custom_call.1']
    #allocation7 [shape = 'u8[65536]{0}', space=vmem, size = 0x10000, scoped, tag = 'input window, operand 4, single buffered']
    #allocation8 [shape = 'u8[65536]{0}', space=vmem, size = 0x10000, scoped, tag = 'input window, operand 7, single buffered']
    #allocation9 [shape = 's32[1]{0}', space=sflag, size = 0x4, scoped, tag = 'scoped memory for tpu_custom_call.1']
    #allocation10 [shape = 'u8[4096]{0}', space=vmem, size = 0x1000, scoped, tag = 'output window, operand 0, single buffered']
    %14 = vsyncpa [#allocation3], 0
    %15 = vsyncpa [#allocation6], 0
    %16 = vsyncpa [#allocation9], 0
    %17 = vsyncpa [#allocation4], 0
    // Predicated region
    $region2: #{tpu_custom_call.1} parent=1 // pred_check
      _
    $region3: #{tpu_custom_call.1} parent=1 // pred_check_branch
      %19 = sbr.rel (0) target = $region5
    $region4: #{tpu_custom_call.1} parent=1 // pred_region
      %s21 = ssub.s32 128, 128
      %22 = vsyncadd [#allocation3], %s21
      %s24 = sshll.u32 [#allocation2], 4
      %s25 = int_to_ptr.vmem [resolvable:$true] %s24
      %27 = dma.hbm_to_vmem [thread:$0]  %s0, 128, %s25, [#allocation3]
    $region5: #{tpu_custom_call.1} parent=1 // pred_fallthru
      _
    // Predicated region
    $region6: #{tpu_custom_call.1} parent=1 // pred_check
      _
    $region7: #{tpu_custom_call.1} parent=1 // pred_check_branch
      %29 = sbr.rel (0) target = $region9
    $region8: #{tpu_custom_call.1} parent=1 // pred_region
      %s31 = ssub.s32 512, 512
      %32 = vsyncadd [#allocation6], %s31
      %s33 = sshll.u32 [#allocation5], 4
      %s34 = int_to_ptr.vmem [resolvable:$true] %s33
      %39 = dma.hbm_to_vmem [thread:$0]  %s1, 512, %s34, [#allocation6], 128, 128, 8
    $region9: #{tpu_custom_call.1} parent=1 // pred_fallthru
      _
    // Predicated region
    $region10: #{tpu_custom_call.1} parent=1 // pred_check
      _
    $region11: #{tpu_custom_call.1} parent=1 // pred_check_branch
      %41 = sbr.rel (0) target = $region13
    $region12: #{tpu_custom_call.1} parent=1 // pred_region
      _
    $region13: #{tpu_custom_call.1} parent=1 // pred_fallthru
      _
    // Predicated region
    $region14: #{tpu_custom_call.1} parent=1 // pred_check
      _
    $region15: #{tpu_custom_call.1} parent=1 // pred_check_branch
      %43 = sbr.rel (0) target = $region17
    $region16: #{tpu_custom_call.1} parent=1 // pred_region
      _
    $region17: #{tpu_custom_call.1} parent=1 // pred_fallthru
      _
    // Predicated region
    $region18: #{tpu_custom_call.1} parent=1 // pred_check
      _
    $region19: #{tpu_custom_call.1} parent=1 // pred_check_branch
      %45 = sbr.rel (0) target = $region21
    $region20: #{tpu_custom_call.1} parent=1 // pred_region
      %s47 = ssub.s32 2048, 2048
      %48 = vsyncadd [#allocation6], %s47
      %s49 = sshll.u32 [#allocation7], 4
      %s50 = int_to_ptr.vmem [resolvable:$true] %s49
      %55 = dma.hbm_to_vmem [thread:$0]  %s4, 2048, %s50, [#allocation6], 128, 128, 8
    $region21: #{tpu_custom_call.1} parent=1 // pred_fallthru
      _
    // Predicated region
    $region22: #{tpu_custom_call.1} parent=1 // pred_check
      _
    $region23: #{tpu_custom_call.1} parent=1 // pred_check_branch
      %57 = sbr.rel (0) target = $region25
    $region24: #{tpu_custom_call.1} parent=1 // pred_region
      _
    $region25: #{tpu_custom_call.1} parent=1 // pred_fallthru
      _
    // Predicated region
    $region26: #{tpu_custom_call.1} parent=1 // pred_check
      _
    $region27: #{tpu_custom_call.1} parent=1 // pred_check_branch
      %59 = sbr.rel (0) target = $region29
    $region28: #{tpu_custom_call.1} parent=1 // pred_region
      _
    $region29: #{tpu_custom_call.1} parent=1 // pred_fallthru
      _
    // Predicated region
    $region30: #{tpu_custom_call.1} parent=1 // pred_check
      _
    $region31: #{tpu_custom_call.1} parent=1 // pred_check_branch
      %61 = sbr.rel (0) target = $region33
    $region32: #{tpu_custom_call.1} parent=1 // pred_region
      %s63 = ssub.s32 2048, 2048
      %64 = vsyncadd [#allocation9], %s63
      %s65 = sshll.u32 [#allocation8], 4
      %s66 = int_to_ptr.vmem [resolvable:$true] %s65
      %71 = dma.hbm_to_vmem [thread:$0]  %s7, 2048, %s66, [#allocation9], 128, 128, 8
    $region33: #{tpu_custom_call.1} parent=1 // pred_fallthru
      _
    // Predicated region
    $region34: #{tpu_custom_call.1} parent=1 // pred_check
      _
    $region35: #{tpu_custom_call.1} parent=1 // pred_check_branch
      %73 = sbr.rel (0) target = $region37
    $region36: #{tpu_custom_call.1} parent=1 // pred_region
      _
    $region37: #{tpu_custom_call.1} parent=1 // pred_fallthru
      _
    // Predicated region
    $region38: #{tpu_custom_call.1} parent=1 // pred_check
      _
    $region39: #{tpu_custom_call.1} parent=1 // pred_check_branch
      %75 = sbr.rel (0) target = $region41
    $region40: #{tpu_custom_call.1} parent=1 // pred_region
      %76 = dma.done [#allocation3], 128
    $region41: #{tpu_custom_call.1} parent=1 // pred_fallthru
      _
    // Predicated region
    $region42: #{tpu_custom_call.1} parent=1 // pred_check
      _
    $region43: #{tpu_custom_call.1} parent=1 // pred_check_branch
      %78 = sbr.rel (0) target = $region45
    $region44: #{tpu_custom_call.1} parent=1 // pred_region
      %79 = dma.done [#allocation6], 512
    $region45: #{tpu_custom_call.1} parent=1 // pred_fallthru
      _
    // Predicated region
    $region46: #{tpu_custom_call.1} parent=1 // pred_check
      _
    $region47: #{tpu_custom_call.1} parent=1 // pred_check_branch
      %81 = sbr.rel (0) target = $region49
    $region48: #{tpu_custom_call.1} parent=1 // pred_region
      %82 = dma.done [#allocation6], 2048
    $region49: #{tpu_custom_call.1} parent=1 // pred_fallthru
      _
    // Predicated region
    $region50: #{tpu_custom_call.1} parent=1 // pred_check
      _
    $region51: #{tpu_custom_call.1} parent=1 // pred_check_branch
      %84 = sbr.rel (0) target = $region53
    $region52: #{tpu_custom_call.1} parent=1 // pred_region
      %85 = dma.done [#allocation9], 2048
    $region53: #{tpu_custom_call.1} parent=1 // pred_fallthru
      _
    %v86 = vld [vmem:[#allocation2] sm:$0xff]
    %v87 = vld [vmem:[#allocation5] sm:$0xff]
    %v88 = vld [vmem:[#allocation5 + $0x8] sm:$0xff]
    %v89 = vld [vmem:[#allocation5 + $0x10] sm:$0xff]
    %v90 = vld [vmem:[#allocation5 + $0x18] sm:$0xff]
    %vm91 = vcmask 261120
    %v93 = vsel %vm91, %v86, 0
    %95 = vmatprep.subr.mxu0 0.0
    %96 = vmatpush1.msra.mxu0 %v87
    %97 = vmatprep.subr.mxu0 0.0
    %98 = vmatpush1.msra.mxu0 %v88
    %99 = vmatprep.subr.mxu0 0.0
    %100 = vmatpush1.msra.mxu0 %v89
    %101 = vmatprep.subr.mxu0 0.0
    %102 = vmatpush1.msra.mxu0 %v90
    %103 = vmatprep.subr.mxu0 0.0
    %104 = vmatpush1.msra.mxu0 0.0
    %105 = vmatprep.subr.mxu0 0.0
    %106 = vmatpush1.msra.mxu0 0.0
    %107 = vmatprep.subr.mxu0 0.0
    %108 = vmatpush1.msra.mxu0 0.0
    %109 = vmatprep.subr.mxu0 0.0
    %110 = vmatpush1.msra.mxu0 0.0
    %111 = vmatprep.subr.mxu0 0.0
    %112 = vmatpush1.msra.mxu0 0.0
    %113 = vmatprep.subr.mxu0 0.0
    %114 = vmatpush1.msra.mxu0 0.0
    %115 = vmatprep.subr.mxu0 0.0
    %116 = vmatpush1.msra.mxu0 0.0
    %117 = vmatprep.subr.mxu0 0.0
    %118 = vmatpush1.msra.mxu0 0.0
    %119 = vmatprep.subr.mxu0 0.0
    %120 = vmatpush1.msra.mxu0 0.0
    %121 = vmatprep.subr.mxu0 0.0
    %122 = vmatpush1.msra.mxu0 0.0
    %123 = vmatprep.subr.mxu0 0.0
    %124 = vmatpush1.msra.mxu0 0.0
    %125 = vmatprep.subr.mxu0 0.0
    %126 = vmatpush1.msra.mxu0 0.0
    %127 = vmatprep.subr.mxu0 0.0
    %128 = vmatpush1.msra.mxu0 0.0
    %129 = vmatprep.subr.mxu0 0.0
    %130 = vmatpush1.msra.mxu0 0.0
    %131 = vmatprep.subr.mxu0 0.0
    %132 = vmatpush1.msra.mxu0 0.0
    %133 = vmatprep.subr.mxu0 0.0
    %134 = vmatpush1.msra.mxu0 0.0
    %135 = vmatprep.subr.mxu0 0.0
    %136 = vmatpush1.msra.mxu0 0.0
    %137 = vmatprep.subr.mxu0 0.0
    %138 = vmatpush1.msra.mxu0 0.0
    %139 = vmatprep.subr.mxu0 0.0
    %140 = vmatpush1.msra.mxu0 0.0
    %141 = vmatprep.subr.mxu0 0.0
    %142 = vmatpush1.msra.mxu0 0.0
    %143 = vmatprep.subr.mxu0 0.0
    %144 = vmatpush1.msra.mxu0 0.0
    %145 = vmatprep.subr.mxu0 0.0
    %146 = vmatpush1.msra.mxu0 0.0
    %147 = vmatprep.subr.mxu0 0.0
    %148 = vmatpush1.msra.mxu0 0.0
    %149 = vmatprep.subr.mxu0 0.0
    %150 = vmatpush1.msra.mxu0 0.0
    %151 = vmatprep.subr.mxu0 0.0
    %152 = vmatpush1.msra.mxu0 0.0
    %153 = vmatprep.subr.mxu0 0.0
    %154 = vmatpush1.msra.mxu0 0.0
    %155 = vmatprep.subr.mxu0 0.0
    %156 = vmatpush1.msra.mxu0 0.0
    %157 = vmatprep.subr.mxu0 0.0
    %158 = vmatpush1.msra.mxu0 0.0
    %159 = vmatprep.mubr.f32.mxu0 0.0
    %160 = vmatmul.mubr.f32.gmra.mrb[0].mxu0 %v93
    %v161 = vpop.f32.mrb[0].mxu0
    %v162 = vadd.f32 0.0, %v161
    %v163 = vpop.f32.mrb[0].mxu0
    %164 = vdwg.mxu0
    %v165 = vld [vmem:[%s2] sm:$0x1]
    %v166 = vld [vmem:[%s3] sm:$0x1]
    %v167 = vrot.slane %v162, 4
    %v168 = vadd.f32 %v162, %v167
    %v169 = vrot.slane %v168, 2
    %v170 = vadd.f32 %v168, %v169
    %v171 = vrot.slane %v170, 1
    %v172 = vadd.f32 %v170, %v171
    %v173 = vrcp.pop 8.0
    %v174 = vmul.f32 %v172, %v173
    %v175 = vmul.f32 %v162, %v162
    %v176 = vrot.slane %v175, 4
    %v177 = vadd.f32 %v175, %v176
    %v178 = vrot.slane %v177, 2
    %v179 = vadd.f32 %v177, %v178
    %v180 = vrot.slane %v179, 1
    %v181 = vadd.f32 %v179, %v180
    %v182 = vmul.f32 %v181, %v173
    %v183 = vmul.f32 %v174, %v174
    %v184 = vsub.f32 %v182, %v183
    %v185 = vmax.f32 %v184, 0.0
    %v186 = vadd.f32 %v185, 1e-05
    %v187 = vrsqrt.pop %v186
    %v188 = vmul.f32 %v165, %v187
    %v189 = vmul.f32 %v174, %v188
    %v190 = vsub.f32 %v166, %v189
    %v192 = vlaneseq
    %v193 = vshrl.u32 %v192, 7
    %v194 = vsub.s32 0, %v193
    %v195 = vrot.slane %v188, %v194
    %v197 = vmul.f32 %v162, %v195
    %v199 = vlaneseq
    %v200 = vshrl.u32 %v199, 7
    %v201 = vsub.s32 0, %v200
    %v202 = vrot.slane %v190, %v201
    %v204 = vadd.f32 %v197, %v202
    %v205 = vmax.f32 %v204, 0.0
    %v206 = vld [vmem:[#allocation7] sm:$0xff]
    %v207 = vld [vmem:[#allocation7 + $0x8] sm:$0xff]
    %v208 = vld [vmem:[#allocation7 + $0x10] sm:$0xff]
    %v209 = vld [vmem:[#allocation7 + $0x18] sm:$0xff]
    %v210 = vld [vmem:[#allocation7 + $0x20] sm:$0xff]
    %v211 = vld [vmem:[#allocation7 + $0x28] sm:$0xff]
    %v212 = vld [vmem:[#allocation7 + $0x30] sm:$0xff]
    %v213 = vld [vmem:[#allocation7 + $0x38] sm:$0xff]
    %v214 = vld [vmem:[#allocation7 + $0x40] sm:$0xff]
    %v215 = vld [vmem:[#allocation7 + $0x48] sm:$0xff]
    %v216 = vld [vmem:[#allocation7 + $0x50] sm:$0xff]
    %v217 = vld [vmem:[#allocation7 + $0x58] sm:$0xff]
    %v218 = vld [vmem:[#allocation7 + $0x60] sm:$0xff]
    %v219 = vld [vmem:[#allocation7 + $0x68] sm:$0xff]
    %v220 = vld [vmem:[#allocation7 + $0x70] sm:$0xff]
    %v221 = vld [vmem:[#allocation7 + $0x78] sm:$0xff]
    %222 = vmatprep.subr.mxu0 0.0
    %223 = vmatpush1.msra.mxu0 %v206
    %224 = vmatprep.subr.mxu0 0.0
    %225 = vmatpush1.msra.mxu0 %v207
    %226 = vmatprep.subr.mxu0 0.0
    %227 = vmatpush1.msra.mxu0 %v208
    %228 = vmatprep.subr.mxu0 0.0
    %229 = vmatpush1.msra.mxu0 %v209
    %230 = vmatprep.subr.mxu0 0.0
    %231 = vmatpush1.msra.mxu0 %v210
    %232 = vmatprep.subr.mxu0 0.0
    %233 = vmatpush1.msra.mxu0 %v211
    %234 = vmatprep.subr.mxu0 0.0
    %235 = vmatpush1.msra.mxu0 %v212
    %236 = vmatprep.subr.mxu0 0.0
    %237 = vmatpush1.msra.mxu0 %v213
    %238 = vmatprep.subr.mxu0 0.0
    %239 = vmatpush1.msra.mxu0 %v214
    %240 = vmatprep.subr.mxu0 0.0
    %241 = vmatpush1.msra.mxu0 %v215
    %242 = vmatprep.subr.mxu0 0.0
    %243 = vmatpush1.msra.mxu0 %v216
    %244 = vmatprep.subr.mxu0 0.0
    %245 = vmatpush1.msra.mxu0 %v217
    %246 = vmatprep.subr.mxu0 0.0
    %247 = vmatpush1.msra.mxu0 %v218
    %248 = vmatprep.subr.mxu0 0.0
    %249 = vmatpush1.msra.mxu0 %v219
    %250 = vmatprep.subr.mxu0 0.0
    %251 = vmatpush1.msra.mxu0 %v220
    %252 = vmatprep.subr.mxu0 0.0
    %253 = vmatpush1.msra.mxu0 %v221
    %254 = vmatprep.subr.mxu0 0.0
    %255 = vmatpush1.msra.mxu0 0.0
    %256 = vmatprep.subr.mxu0 0.0
    %257 = vmatpush1.msra.mxu0 0.0
    %258 = vmatprep.subr.mxu0 0.0
    %259 = vmatpush1.msra.mxu0 0.0
    %260 = vmatprep.subr.mxu0 0.0
    %261 = vmatpush1.msra.mxu0 0.0
    %262 = vmatprep.subr.mxu0 0.0
    %263 = vmatpush1.msra.mxu0 0.0
    %264 = vmatprep.subr.mxu0 0.0
    %265 = vmatpush1.msra.mxu0 0.0
    %266 = vmatprep.subr.mxu0 0.0
    %267 = vmatpush1.msra.mxu0 0.0
    %268 = vmatprep.subr.mxu0 0.0
    %269 = vmatpush1.msra.mxu0 0.0
    %270 = vmatprep.subr.mxu0 0.0
    %271 = vmatpush1.msra.mxu0 0.0
    %272 = vmatprep.subr.mxu0 0.0
    %273 = vmatpush1.msra.mxu0 0.0
    %274 = vmatprep.subr.mxu0 0.0
    %275 = vmatpush1.msra.mxu0 0.0
    %276 = vmatprep.subr.mxu0 0.0
    %277 = vmatpush1.msra.mxu0 0.0
    %278 = vmatprep.subr.mxu0 0.0
    %279 = vmatpush1.msra.mxu0 0.0
    %280 = vmatprep.subr.mxu0 0.0
    %281 = vmatpush1.msra.mxu0 0.0
    %282 = vmatprep.subr.mxu0 0.0
    %283 = vmatpush1.msra.mxu0 0.0
    %284 = vmatprep.subr.mxu0 0.0
    %285 = vmatpush1.msra.mxu0 0.0
    %286 = vmatprep.mubr.f32.mxu0 0.0
    %287 = vmatmul.mubr.f32.gmra.mrb[0].mxu0 %v205
    %v288 = vpop.f32.mrb[0].mxu0
    %v289 = vadd.f32 0.0, %v288
    %v290 = vpop.f32.mrb[0].mxu0
    %291 = vdwg.mxu0
    %v292 = vld [vmem:[%s5] sm:$0x1]
    %v293 = vld [vmem:[%s6] sm:$0x1]
    %v294 = vrot.slane %v289, 4
    %v295 = vadd.f32 %v289, %v294
    %v296 = vrot.slane %v295, 2
    %v297 = vadd.f32 %v295, %v296
    %v298 = vrot.slane %v297, 1
    %v299 = vadd.f32 %v297, %v298
    %v300 = vmul.f32 %v299, %v173
    %v301 = vmul.f32 %v289, %v289
    %v302 = vrot.slane %v301, 4
    %v303 = vadd.f32 %v301, %v302
    %v304 = vrot.slane %v303, 2
    %v305 = vadd.f32 %v303, %v304
    %v306 = vrot.slane %v305, 1
    %v307 = vadd.f32 %v305, %v306
    %v308 = vmul.f32 %v307, %v173
    %v309 = vmul.f32 %v300, %v300
    %v310 = vsub.f32 %v308, %v309
    %v311 = vmax.f32 %v310, 0.0
    %v312 = vadd.f32 %v311, 1e-05
    %v313 = vrsqrt.pop %v312
    %v314 = vmul.f32 %v292, %v313
    %v315 = vmul.f32 %v300, %v314
    %v316 = vsub.f32 %v293, %v315
    %v318 = vlaneseq
    %v319 = vshrl.u32 %v318, 7
    %v320 = vsub.s32 0, %v319
    %v321 = vrot.slane %v314, %v320
    %v323 = vmul.f32 %v289, %v321
    %v325 = vlaneseq
    %v326 = vshrl.u32 %v325, 7
    %v327 = vsub.s32 0, %v326
    %v328 = vrot.slane %v316, %v327
    %v330 = vadd.f32 %v323, %v328
    %v331 = vmax.f32 %v330, 0.0
    %v332 = vld [vmem:[#allocation8] sm:$0xff]
    %v333 = vld [vmem:[#allocation8 + $0x8] sm:$0xff]
    %v334 = vld [vmem:[#allocation8 + $0x10] sm:$0xff]
    %v335 = vld [vmem:[#allocation8 + $0x18] sm:$0xff]
    %v336 = vld [vmem:[#allocation8 + $0x20] sm:$0xff]
    %v337 = vld [vmem:[#allocation8 + $0x28] sm:$0xff]
    %v338 = vld [vmem:[#allocation8 + $0x30] sm:$0xff]
    %v339 = vld [vmem:[#allocation8 + $0x38] sm:$0xff]
    %v340 = vld [vmem:[#allocation8 + $0x40] sm:$0xff]
    %v341 = vld [vmem:[#allocation8 + $0x48] sm:$0xff]
    %v342 = vld [vmem:[#allocation8 + $0x50] sm:$0xff]
    %v343 = vld [vmem:[#allocation8 + $0x58] sm:$0xff]
    %v344 = vld [vmem:[#allocation8 + $0x60] sm:$0xff]
    %v345 = vld [vmem:[#allocation8 + $0x68] sm:$0xff]
    %v346 = vld [vmem:[#allocation8 + $0x70] sm:$0xff]
    %v347 = vld [vmem:[#allocation8 + $0x78] sm:$0xff]
    %v348 = vld [vmem:[%s8] sm:$0x1]
    %v350 = vlaneseq
    %v351 = vshrl.u32 %v350, 7
    %v352 = vsub.s32 0, %v351
    %v353 = vrot.slane %v348, %v352
    %355 = vmatprep.subr.mxu0 0.0
    %356 = vmatpush1.msra.mxu0 %v332
    %357 = vmatprep.subr.mxu0 0.0
    %358 = vmatpush1.msra.mxu0 %v333
    %359 = vmatprep.subr.mxu0 0.0
    %360 = vmatpush1.msra.mxu0 %v334
    %361 = vmatprep.subr.mxu0 0.0
    %362 = vmatpush1.msra.mxu0 %v335
    %363 = vmatprep.subr.mxu0 0.0
    %364 = vmatpush1.msra.mxu0 %v336
    %365 = vmatprep.subr.mxu0 0.0
    %366 = vmatpush1.msra.mxu0 %v337
    %367 = vmatprep.subr.mxu0 0.0
    %368 = vmatpush1.msra.mxu0 %v338
    %369 = vmatprep.subr.mxu0 0.0
    %370 = vmatpush1.msra.mxu0 %v339
    %371 = vmatprep.subr.mxu0 0.0
    %372 = vmatpush1.msra.mxu0 %v340
    %373 = vmatprep.subr.mxu0 0.0
    %374 = vmatpush1.msra.mxu0 %v341
    %375 = vmatprep.subr.mxu0 0.0
    %376 = vmatpush1.msra.mxu0 %v342
    %377 = vmatprep.subr.mxu0 0.0
    %378 = vmatpush1.msra.mxu0 %v343
    %379 = vmatprep.subr.mxu0 0.0
    %380 = vmatpush1.msra.mxu0 %v344
    %381 = vmatprep.subr.mxu0 0.0
    %382 = vmatpush1.msra.mxu0 %v345
    %383 = vmatprep.subr.mxu0 0.0
    %384 = vmatpush1.msra.mxu0 %v346
    %385 = vmatprep.subr.mxu0 0.0
    %386 = vmatpush1.msra.mxu0 %v347
    %387 = vmatprep.subr.mxu0 0.0
    %388 = vmatpush1.msra.mxu0 0.0
    %389 = vmatprep.subr.mxu0 0.0
    %390 = vmatpush1.msra.mxu0 0.0
    %391 = vmatprep.subr.mxu0 0.0
    %392 = vmatpush1.msra.mxu0 0.0
    %393 = vmatprep.subr.mxu0 0.0
    %394 = vmatpush1.msra.mxu0 0.0
    %395 = vmatprep.subr.mxu0 0.0
    %396 = vmatpush1.msra.mxu0 0.0
    %397 = vmatprep.subr.mxu0 0.0
    %398 = vmatpush1.msra.mxu0 0.0
    %399 = vmatprep.subr.mxu0 0.0
    %400 = vmatpush1.msra.mxu0 0.0
    %401 = vmatprep.subr.mxu0 0.0
    %402 = vmatpush1.msra.mxu0 0.0
    %403 = vmatprep.subr.mxu0 0.0
    %404 = vmatpush1.msra.mxu0 0.0
    %405 = vmatprep.subr.mxu0 0.0
    %406 = vmatpush1.msra.mxu0 0.0
    %407 = vmatprep.subr.mxu0 0.0
    %408 = vmatpush1.msra.mxu0 0.0
    %409 = vmatprep.subr.mxu0 0.0
    %410 = vmatpush1.msra.mxu0 0.0
    %411 = vmatprep.subr.mxu0 0.0
    %412 = vmatpush1.msra.mxu0 0.0
    %413 = vmatprep.subr.mxu0 0.0
    %414 = vmatpush1.msra.mxu0 0.0
    %415 = vmatprep.subr.mxu0 0.0
    %416 = vmatpush1.msra.mxu0 0.0
    %417 = vmatprep.subr.mxu0 0.0
    %418 = vmatpush1.msra.mxu0 0.0
    %419 = vmatprep.mubr.f32.mxu0 0.0
    %420 = vmatmul.mubr.f32.gmra.mrb[0].mxu0 %v331
    %v421 = vpop.f32.mrb[0].mxu0
    %v422 = vadd.f32 %v353, %v421
    %v423 = vpop.f32.mrb[0].mxu0
    %424 = vdwg.mxu0
    %425 = vmax.xlane.f32.xlu0 %v422
    %v426 = vpop.xlane.xlu0 %425
    %v427 = vsub.f32 %v422, %v426
    %v428 = vmul.f32 %v427, 1.442695
    %v429 = vpow.pop %v428
    %430 = vadd.xlane.f32.xlu0 %v429
    %v431 = vpop.xlane.xlu0 %430
    %v432 = vrcp.pop %v431
    %v433 = vmul.f32 %v431, %v432
    %v434 = vsub.f32 2.0, %v433
    %v435 = vmul.f32 %v432, %v434
    %v436 = vmul.f32 %v429, %v435
    %437 = vst [vmem:[#allocation10] sm:$0xff] %v436
    // Predicated region
    $region54: #{tpu_custom_call.1} parent=1 // pred_check
      _
    $region55: #{tpu_custom_call.1} parent=1 // pred_check_branch
      %439 = sbr.rel (0) target = $region57
    $region56: #{tpu_custom_call.1} parent=1 // pred_region
      %s441 = ssub.s32 128, 128
      %442 = vsyncadd [#allocation4], %s441
      %s444 = sshll.u32 [#allocation10], 4
      %s445 = int_to_ptr.vmem [resolvable:$true] %s444
      %447 = dma.vmem_to_hbm [thread:$0]  %s445, 128, %s9, [#allocation4]
    $region57: #{tpu_custom_call.1} parent=1 // pred_fallthru
      _
    // Predicated region
    $region58: #{tpu_custom_call.1} parent=1 // pred_check
      _
    $region59: #{tpu_custom_call.1} parent=1 // pred_check_branch
      %449 = sbr.rel (0) target = $region61
    $region60: #{tpu_custom_call.1} parent=1 // pred_region
      %450 = dma.done [#allocation4], 128
    $region61: #{tpu_custom_call.1} parent=1 // pred_fallthru
      _
    %451 = vsyncpa [#allocation3], 1
    %452 = vsyncpa [#allocation6], 1
    %453 = vsyncpa [#allocation9], 1
    %454 = vsyncpa [#allocation4], 1

</llo_original>
